<compile_context>
chip_gen: v6e
topology: v6e:2x2x1
jax: 0.10.0
libtpu: 0.0.40
codegen_flags: <defaults>
</compile_context>

<pallas_src>
import functools

import jax
import jax.numpy as jnp
from jax.experimental import pallas as pl
from jax.experimental.pallas import tpu as pltpu


# ---------------------------------------------------------------------------
# helpers
# ---------------------------------------------------------------------------

def _round_up(a, b):
    return (a + b - 1) // b * b


def _pad2d(a, rows, cols, dtype):
    out = jnp.zeros((rows, cols), dtype)
    return out.at[: a.shape[0], : a.shape[1]].set(a.astype(dtype))


def _vmem_budget():
    """(bytes we may plan with, compiler vmem_limit_bytes), per generation."""
    try:
        cap = int(pltpu.get_tpu_info().vmem_capacity_bytes)
    except Exception:
        cap = 64 * 1024 * 1024          # safe floor: v7x physical per-TC
    return int(cap * 0.6), int(cap * 0.8)


def _largest_tile(n_pad, cap):
    """Largest multiple of 128 that divides n_pad and is <= cap (min 128)."""
    cap = max(128, min(int(cap), n_pad))
    t = (cap // 128) * 128
    while t > 128 and n_pad % t != 0:
        t -= 128
    return t


def _select_tiles(n_pad, c_in, c_out, adj_bytes, feat_bytes, out_bytes, budget):
    """Pick (tm, tk) = (row tile, K tile) that fit the VMEM budget."""
    # Resident operands (counted double-buffered, conservatively).
    resident = 2 * n_pad * c_in * feat_bytes        # X / H (constant block)
    resident += 2 * c_in * c_out * feat_bytes       # W
    resident += 2 * c_out * 4                       # bias (f32)

    def fits(tm, tk):
        use = resident
        use += 2 * tm * tk * adj_bytes               # Â slab, double-buffered
        use += 2 * tm * c_out * out_bytes            # output tile
        if tk < n_pad:
            use += tm * c_out * 4                    # f32 accumulator scratch
        return use <= budget

    tm_cap = min(1024, n_pad)
    if n_pad >= 256:
        tm_cap = min(tm_cap, n_pad // 2)   # keep >=2 row blocks (v7x megacore)
    tm = _largest_tile(n_pad, tm_cap)
    while tm > 128 and not fits(tm, 128):
        tm = _largest_tile(n_pad, tm - 128)

    avail = budget - resident - 2 * tm * c_out * out_bytes - tm * c_out * 4
    tk_cap = max(128, avail // (2 * tm * adj_bytes))
    tk = _largest_tile(n_pad, tk_cap)
    return tm, tk


def prepare_adjacency(edge_index, num_nodes, n_pad, dtype):
    """Dense Â = D^{-1/2}(A + I)D^{-1/2} built directly into the padded buffer.

    GCNConv convention (row=dst, col=src); duplicate edges scatter-ADD so they
    accumulate like PyG messages.  Depends only on edge_index -> cache it and
    pass via graph_cnn_forward(adj=...) across repeated forwards."""
    src = edge_index[0]
    dst = edge_index[1]
    a = jnp.zeros((n_pad, n_pad), jnp.float32)
    a = a.at[dst, src].add(1.0)
    idx = jnp.arange(n_pad)
    a = a.at[idx, idx].add((idx < num_nodes).astype(jnp.float32))  # self loops
    deg = jnp.sum(a, axis=1)
    dinv = jnp.where(deg > 0, jax.lax.rsqrt(deg), 0.0)
    return (dinv[:, None] * a * dinv[None, :]).astype(dtype)


# ---------------------------------------------------------------------------
# fused GCN layer kernel:  out = epilogue(Â @ (X @ W) + b)
# ---------------------------------------------------------------------------

def _gcn_layer_kernel(adj_ref, x_ref, w_ref, b_ref, o_ref, *scratch,
                      epilogue, valid_cols, tk, num_k):
    k = pl.program_id(1)

    # K-slab of transformed features: F_k = X[k*tk:(k+1)*tk, :] @ W.
    # Recomputed per row tile -- free, the kernel is HBM-bound on the Â stream.
    if num_k == 1:
        x_slab = x_ref[...]
    else:
        start = pl.multiple_of(k * tk, tk)
        x_slab = x_ref[pl.ds(start, tk), :]
    f_k = jnp.dot(x_slab, w_ref[...], preferred_element_type=jnp.float32)
    part = jnp.dot(adj_ref[...], f_k.astype(adj_ref.dtype),
                   preferred_element_type=jnp.float32)

    def finalize(z):
        z = z + b_ref[...].astype(jnp.float32)            # bias added once
        if epilogue == "relu":
            return jnp.maximum(z, 0.0).astype(o_ref.dtype)
        # masked log_softmax over the valid (unpadded) channel columns
        col = jax.lax.broadcasted_iota(jnp.int32, z.shape, 1)
        z = jnp.where(col < valid_cols, z, -1e30)         # finite mask, no inf
        m = jnp.max(z, axis=1, keepdims=True)
        zs = z - m
        lse = jnp.log(jnp.sum(jnp.exp(zs), axis=1, keepdims=True))
        return (zs - lse).astype(o_ref.dtype)

    if num_k == 1:
        # Single K pass: no accumulator, no init/finalize bookkeeping.
        o_ref[...] = finalize(part)
    else:
        acc_ref = scratch[0]

        @pl.when(k == 0)
        def _init():
            acc_ref[...] = jnp.zeros_like(acc_ref)

        acc_ref[...] += part

        @pl.when(k == num_k - 1)
        def _finalize():
            o_ref[...] = finalize(acc_ref[...])


def _gcn_layer(adj, x, w, b, *, tm, tk, epilogue, valid_cols, out_dtype,
               vmem_limit):
    n_pad = adj.shape[0]
    c_in = x.shape[1]
    c_out = w.shape[1]
    num_k = n_pad // tk
    kernel = functools.partial(_gcn_layer_kernel, epilogue=epilogue,
                               valid_cols=valid_cols, tk=tk, num_k=num_k)
    scratch = [] if num_k == 1 else [pltpu.VMEM((tm, c_out), jnp.float32)]
    cost = pl.CostEstimate(
        flops=2 * n_pad * n_pad * c_out
        + 2 * (n_pad // tm) * n_pad * c_in * c_out,
        transcendentals=(n_pad * c_out) if epilogue == "log_softmax" else 0,
        bytes_accessed=n_pad * n_pad * adj.dtype.itemsize
        + n_pad * c_in * x.dtype.itemsize
        + c_in * c_out * w.dtype.itemsize
        + n_pad * c_out * jnp.dtype(out_dtype).itemsize,
    )
    return pl.pallas_call(
        kernel,
        out_shape=jax.ShapeDtypeStruct((n_pad, c_out), out_dtype),
        grid_spec=pltpu.PrefetchScalarGridSpec(
            num_scalar_prefetch=0,
            grid=(n_pad // tm, num_k),                      # reduction axis last
            in_specs=[
                pl.BlockSpec((tm, tk), lambda i, k: (i, k)),        # Â tile
                pl.BlockSpec((n_pad, c_in), lambda i, k: (0, 0)),   # X resident
                pl.BlockSpec((c_in, c_out), lambda i, k: (0, 0)),   # W resident
                pl.BlockSpec((1, c_out), lambda i, k: (0, 0)),      # bias
            ],
            out_specs=pl.BlockSpec((tm, c_out), lambda i, k: (i, 0)),
            scratch_shapes=scratch,
        ),
        compiler_params=pltpu.CompilerParams(
            dimension_semantics=("parallel", "arbitrary"),
            vmem_limit_bytes=vmem_limit,
        ),
        cost_estimate=cost,
    )(adj, x, w, b)


# ---------------------------------------------------------------------------
# forward pass
# ---------------------------------------------------------------------------

def graph_cnn_forward(x, edge_index, params, *, dropout=0.0, training=False,
                      compute_dtype=jnp.bfloat16, adj=None):
    del dropout, training  # TODO(synk): inference mode only -> dropout = identity
    n, in_c = x.shape
    hid_c = params["w1"].shape[1]
    out_c = params["w2"].shape[1]

    # --- padding (lane-dense channels, N padded to 128 only) ----------------
    n_pad = _round_up(n, 128)
    in_pad = _round_up(in_c, 128)
    hid_pad = _round_up(hid_c, 128)
    out_pad = _round_up(out_c, 128)

    budget, vmem_limit = _vmem_budget()
    itemsize = jnp.dtype(compute_dtype).itemsize
    tm, tk = _select_tiles(
        n_pad, max(in_pad, hid_pad), max(hid_pad, out_pad),
        adj_bytes=itemsize, feat_bytes=itemsize, out_bytes=4, budget=budget)

    assert tm % 8 == 0 and tk % 128 == 0, (tm, tk)
    assert n_pad % tm == 0 and n_pad % tk == 0, (n_pad, tm, tk)

    # --- operand prep (plain-JAX glue; Â is cacheable via adj=) -------------
    if adj is None:
        adj = prepare_adjacency(edge_index, n, n_pad, compute_dtype)
    x_p = _pad2d(x, n_pad, in_pad, compute_dtype)
    w1_p = _pad2d(params["w1"], in_pad, hid_pad, compute_dtype)
    w2_p = _pad2d(params["w2"], hid_pad, out_pad, compute_dtype)
    b1_p = _pad2d(params["b1"], 1, hid_pad, jnp.float32)
    b2_p = _pad2d(params["b2"], 1, out_pad, jnp.float32)

    # --- layer 1: relu(Â @ (X W1) + b1) -------------------------------------
    h = _gcn_layer(adj, x_p, w1_p, b1_p, tm=tm, tk=tk, epilogue="relu",
                   valid_cols=hid_c, out_dtype=compute_dtype,
                   vmem_limit=vmem_limit)

    # --- layer 2: log_softmax(Â @ (H W2) + b2, dim=1) ------------------------
    z = _gcn_layer(adj, h, w2_p, b2_p, tm=tm, tk=tk, epilogue="log_softmax",
                   valid_cols=out_c, out_dtype=jnp.float32,
                   vmem_limit=vmem_limit)

    return z[:n, :out_c]


# ---------------------------------------------------------------------------
# params / reference / test
# ---------------------------------------------------------------------------

def init_params(key, in_c, hid_c, out_c):
    k1, k2, k3, k4 = jax.random.split(key, 4)
    w1 = jax.random.normal(k1, (in_c, hid_c), jnp.float32) * (1.0 / jnp.sqrt(in_c))
    w2 = jax.random.normal(k2, (hid_c, out_c), jnp.float32) * (1.0 / jnp.sqrt(hid_c))
    b1 = jax.random.normal(k3, (1, hid_c), jnp.float32) * 0.1
    b2 = jax.random.normal(k4, (1, out_c), jnp.float32) * 0.1
    return {"w1": w1, "b1": b1, "w2": w2, "b2": b2}


def reference_forward(x, edge_index, params):
    adj = prepare_adjacency(edge_index, x.shape[0], x.shape[0], jnp.float32)
    h = adj @ (x @ params["w1"]) + params["b1"]
    h = jnp.maximum(h, 0.0)
    z = adj @ (h @ params["w2"]) + params["b2"]
    return jax.nn.log_softmax(z, axis=1)


if __name__ == "__main__":
    key = jax.random.PRNGKey(0)
    k_x, k_e, k_p = jax.random.split(key, 3)

    N, IN_C, HID_C, OUT_C = 16, 4, 32, 8
    E = 40

    x = jax.random.normal(k_x, (N, IN_C), jnp.float32)
    edge_index = jax.random.randint(k_e, (2, E), 0, N, dtype=jnp.int32)
    params = init_params(k_p, IN_C, HID_C, OUT_C)

    ref = reference_forward(x, edge_index, params)

    # Precompute / cache the padded normalized adjacency (depends only on
    # edge_index) and reuse it across forward calls.
    adj_cached = prepare_adjacency(edge_index, N, _round_up(N, 128), jnp.bfloat16)

    # Recommended config: bf16 MXU inputs, f32 accumulation / elementwise.
    out = graph_cnn_forward(x, edge_index, params, compute_dtype=jnp.bfloat16,
                            adj=adj_cached)
    out = jax.block_until_ready(out)
    assert out.shape == (N, OUT_C)
    assert bool(jnp.isfinite(out).all())
    assert jnp.allclose(out, ref, atol=7e-2, rtol=7e-2), \
        float(jnp.max(jnp.abs(out - ref)))

    # f32 path for a tight numerical check against the reference.
    out_f32 = jax.block_until_ready(
        graph_cnn_forward(x, edge_index, params, compute_dtype=jnp.float32))
    assert jnp.allclose(out_f32, ref, atol=1e-4, rtol=1e-4), \
        float(jnp.max(jnp.abs(out_f32 - ref)))

    print("KERNEL_OK")
</pallas_src>

<mosaic_0001>
module attributes {stable_mosaic.version = 11 : i64} {
  func.func @_gcn_layer_kernel(%arg0: i32, %arg1: i32, %arg2: memref<128x128xbf16, #tpu.memory_space<vmem>>, %arg3: memref<128x128xbf16, #tpu.memory_space<vmem>>, %arg4: memref<128x128xbf16, #tpu.memory_space<vmem>>, %arg5: memref<1x128xf32, #tpu.memory_space<vmem>>, %arg6: memref<128x128xbf16, #tpu.memory_space<vmem>>) attributes {dimension_semantics = [#tpu.dimension_semantics<parallel>, #tpu.dimension_semantics<arbitrary>], iteration_bounds = array<i64: 1, 1>, scalar_prefetch = 0 : i64, scratch_operands = 0 : i64, tpu.core_type = #tpu.core_type<tc>, window_params = [{transform_indices = @transform_0, window_bounds = array<i64: 128, 128>}, {pipeline_mode = #tpu.pipeline_mode<synchronous>, transform_indices = @transform_1, window_bounds = array<i64: 128, 128>}, {pipeline_mode = #tpu.pipeline_mode<synchronous>, transform_indices = @transform_2, window_bounds = array<i64: 128, 128>}, {pipeline_mode = #tpu.pipeline_mode<synchronous>, transform_indices = @transform_3, window_bounds = array<i64: 1, 128>}, {transform_indices = @transform_4, window_bounds = array<i64: 128, 128>}]} {
    %c0 = arith.constant 0 : index
    %c0_0 = arith.constant 0 : index
    %0 = vector.load %arg3[%c0, %c0_0] : memref<128x128xbf16, #tpu.memory_space<vmem>>, vector<128x128xbf16>
    %c0_1 = arith.constant 0 : index
    %c0_2 = arith.constant 0 : index
    %1 = vector.load %arg4[%c0_1, %c0_2] : memref<128x128xbf16, #tpu.memory_space<vmem>>, vector<128x128xbf16>
    %cst = arith.constant dense<0.000000e+00> : vector<128x128xf32>
    %2 = tpu.matmul %0, %1, %cst {dimension_numbers = #tpu.dot_dimension_numbers<[1], [0], [0], [1], [0, 0, 1, 1], [], []>} : vector<128x128xbf16>, vector<128x128xbf16>, vector<128x128xf32> -> vector<128x128xf32>
    %c0_3 = arith.constant 0 : index
    %c0_4 = arith.constant 0 : index
    %3 = vector.load %arg2[%c0_3, %c0_4] : memref<128x128xbf16, #tpu.memory_space<vmem>>, vector<128x128xbf16>
    %4 = arith.truncf %2 : vector<128x128xf32> to vector<128x128xbf16>
    %cst_5 = arith.constant dense<0.000000e+00> : vector<128x128xf32>
    %5 = tpu.matmul %3, %4, %cst_5 {dimension_numbers = #tpu.dot_dimension_numbers<[1], [0], [0], [1], [0, 0, 1, 1], [], []>} : vector<128x128xbf16>, vector<128x128xbf16>, vector<128x128xf32> -> vector<128x128xf32>
    %c0_6 = arith.constant 0 : index
    %c0_7 = arith.constant 0 : index
    %6 = vector.load %arg5[%c0_6, %c0_7] : memref<1x128xf32, #tpu.memory_space<vmem>>, vector<1x128xf32>
    %7 = vector.broadcast %6 : vector<1x128xf32> to vector<128x128xf32>
    %8 = arith.addf %5, %7 : vector<128x128xf32>
    %cst_8 = arith.constant 0.000000e+00 : f32
    %9 = vector.broadcast %cst_8 : f32 to vector<128x128xf32>
    %10 = arith.maximumf %8, %9 : vector<128x128xf32>
    %11 = arith.truncf %10 : vector<128x128xf32> to vector<128x128xbf16>
    %c0_9 = arith.constant 0 : index
    %c0_10 = arith.constant 0 : index
    %12 = vector.load %arg6[%c0_9, %c0_10] : memref<128x128xbf16, #tpu.memory_space<vmem>>, vector<128x128xbf16>
    tpu.vector_store %arg6[%c0_9, %c0_10], %11 {strides = array<i32>} : memref<128x128xbf16, #tpu.memory_space<vmem>>, vector<128x128xbf16>,
    return
  }
  func.func @transform_0(%arg0: i32, %arg1: i32) -> (i32, i32) {
    %c0_i32 = arith.constant 0 : i32
    return %arg0, %arg1 : i32, i32
  }
  func.func @transform_1(%arg0: i32, %arg1: i32) -> (i32, i32) {
    %c0_i32 = arith.constant 0 : i32
    %c0_i32_0 = arith.constant 0 : i32
    %c0_i32_1 = arith.constant 0 : i32
    return %c0_i32, %c0_i32_0 : i32, i32
  }
  func.func @transform_2(%arg0: i32, %arg1: i32) -> (i32, i32) {
    %c0_i32 = arith.constant 0 : i32
    %c0_i32_0 = arith.constant 0 : i32
    %c0_i32_1 = arith.constant 0 : i32
    return %c0_i32, %c0_i32_0 : i32, i32
  }
  func.func @transform_3(%arg0: i32, %arg1: i32) -> (i32, i32) {
    %c0_i32 = arith.constant 0 : i32
    %c0_i32_0 = arith.constant 0 : i32
    %c0_i32_1 = arith.constant 0 : i32
    return %c0_i32, %c0_i32_0 : i32, i32
  }
  func.func @transform_4(%arg0: i32, %arg1: i32) -> (i32, i32) {
    %c0_i32 = arith.constant 0 : i32
    %c0_i32_0 = arith.constant 0 : i32
    return %arg0, %c0_i32 : i32, i32
  }
}

</mosaic_0001>

<llo_original>
// kernel: tpu_custom_call.1
$region0: #{tpu_custom_call.1}
  #allocation0 [shape = 'u32[]', space=smem, size = 0x4, offset = 0x4, fixed_abs, tag = 'smem constant byte address 0x4 - core index']
  #allocation1 [shape = 'u32[144,128]{1,0:T(1,128)}', space=vmem, size = 0x12000, scoped, tag = 'internal scratch']
  %s0 = inlined_call_operand.hbm [shape: bf16[128,128], index: 0, kind: input, shape index: {}]
  %s1 = inlined_call_operand.hbm [shape: bf16[128,128], index: 1, kind: input, shape index: {}]
  %s2 = inlined_call_operand.hbm [shape: bf16[128,128], index: 2, kind: input, shape index: {}]
  %s3 = inlined_call_operand.vmem [shape: f32[1,128], index: 3, kind: input, shape index: {}]
  %s4 = inlined_call_operand.hbm [shape: bf16[128,128], index: 4, kind: output, shape index: {}]
  %s5 = sld [smem:[#allocation0]]
  $region38: #{tpu_custom_call.1} parent=0
    _
  %s7 = ssub.s32 1, %s5
  %s8 = scalar_select 0, %s7, %s5
  $region1: #{tpu_custom_call.1} parent=0
    #allocation2 [shape = 'u8[32768]{0}', space=vmem, size = 0x8000, scoped, tag = 'input window, operand 0, single buffered']
    #allocation3 [shape = 's32[1]{0}', space=sflag, size = 0x4, scoped, tag = 'scoped memory for tpu_custom_call.1']
    #allocation4 [shape = 's32[1]{0}', space=sflag, size = 0x4, scoped, tag = 'scoped memory for tpu_custom_call.1']
    #allocation5 [shape = 'u8[32768]{0}', space=vmem, size = 0x8000, scoped, tag = 'input window, operand 1, single buffered']
    #allocation6 [shape = 's32[1]{0}', space=sflag, size = 0x4, scoped, tag = 'scoped memory for tpu_custom_call.1']
    #allocation7 [shape = 'u8[32768]{0}', space=vmem, size = 0x8000, scoped, tag = 'input window, operand 2, single buffered']
    #allocation8 [shape = 'u8[32768]{0}', space=vmem, size = 0x8000, scoped, tag = 'output window, operand 0, single buffered']
    %9 = vsyncpa [#allocation3], 0
    %10 = vsyncpa [#allocation6], 0
    %11 = vsyncpa [#allocation4], 0
    // Predicated region
    $region2: #{tpu_custom_call.1} parent=1 // pred_check
      _
    $region3: #{tpu_custom_call.1} parent=1 // pred_check_branch
      %13 = sbr.rel (0) target = $region5
    $region4: #{tpu_custom_call.1} parent=1 // pred_region
      %s15 = ssub.s32 1024, 1024
      %16 = vsyncadd [#allocation3], %s15
      %s17 = sshll.u32 [#allocation2], 4
      %s18 = int_to_ptr.vmem [resolvable:$true] %s17
      %23 = dma.hbm_to_vmem [thread:$0]  %s0, 1024, %s18, [#allocation3], 64, 64, 4
    $region5: #{tpu_custom_call.1} parent=1 // pred_fallthru
      _
    // Predicated region
    $region6: #{tpu_custom_call.1} parent=1 // pred_check
      _
    $region7: #{tpu_custom_call.1} parent=1 // pred_check_branch
      %25 = sbr.rel (0) target = $region9
    $region8: #{tpu_custom_call.1} parent=1 // pred_region
      %s27 = ssub.s32 1024, 1024
      %28 = vsyncadd [#allocation6], %s27
      %s29 = sshll.u32 [#allocation5], 4
      %s30 = int_to_ptr.vmem [resolvable:$true] %s29
      %35 = dma.hbm_to_vmem [thread:$0]  %s1, 1024, %s30, [#allocation6], 64, 64, 4
    $region9: #{tpu_custom_call.1} parent=1 // pred_fallthru
      _
    // Predicated region
    $region10: #{tpu_custom_call.1} parent=1 // pred_check
      _
    $region11: #{tpu_custom_call.1} parent=1 // pred_check_branch
      %37 = sbr.rel (0) target = $region13
    $region12: #{tpu_custom_call.1} parent=1 // pred_region
      %s39 = ssub.s32 1024, 1024
      %40 = vsyncadd [#allocation6], %s39
      %s41 = sshll.u32 [#allocation7], 4
      %s42 = int_to_ptr.vmem [resolvable:$true] %s41
      %47 = dma.hbm_to_vmem [thread:$0]  %s2, 1024, %s42, [#allocation6], 64, 64, 4
    $region13: #{tpu_custom_call.1} parent=1 // pred_fallthru
      _
    // Predicated region
    $region14: #{tpu_custom_call.1} parent=1 // pred_check
      _
    $region15: #{tpu_custom_call.1} parent=1 // pred_check_branch
      %49 = sbr.rel (0) target = $region17
    $region16: #{tpu_custom_call.1} parent=1 // pred_region
      _
    $region17: #{tpu_custom_call.1} parent=1 // pred_fallthru
      _
    // Predicated region
    $region18: #{tpu_custom_call.1} parent=1 // pred_check
      _
    $region19: #{tpu_custom_call.1} parent=1 // pred_check_branch
      %51 = sbr.rel (0) target = $region21
    $region20: #{tpu_custom_call.1} parent=1 // pred_region
      %52 = dma.done [#allocation3], 1024
    $region21: #{tpu_custom_call.1} parent=1 // pred_fallthru
      _
    // Predicated region
    $region22: #{tpu_custom_call.1} parent=1 // pred_check
      _
    $region23: #{tpu_custom_call.1} parent=1 // pred_check_branch
      %54 = sbr.rel (0) target = $region25
    $region24: #{tpu_custom_call.1} parent=1 // pred_region
      %55 = dma.done [#allocation6], 1024
    $region25: #{tpu_custom_call.1} parent=1 // pred_fallthru
      _
    // Predicated region
    $region26: #{tpu_custom_call.1} parent=1 // pred_check
      _
    $region27: #{tpu_custom_call.1} parent=1 // pred_check_branch
      %57 = sbr.rel (0) target = $region29
    $region28: #{tpu_custom_call.1} parent=1 // pred_region
      %58 = dma.done [#allocation6], 1024
    $region29: #{tpu_custom_call.1} parent=1 // pred_fallthru
      _
    %v60 = vld [vmem:[#allocation5] sm:$0xf]
    %v61 = vld [vmem:[#allocation5 + $0x4] sm:$0xf]
    %v62 = vld [vmem:[#allocation5 + $0x8] sm:$0xf]
    %v63 = vld [vmem:[#allocation5 + $0xc] sm:$0xf]
    %v64 = vld [vmem:[#allocation5 + $0x10] sm:$0xf]
    %v65 = vld [vmem:[#allocation5 + $0x14] sm:$0xf]
    %v66 = vld [vmem:[#allocation5 + $0x18] sm:$0xf]
    %v67 = vld [vmem:[#allocation5 + $0x1c] sm:$0xf]
    %v68 = vld [vmem:[#allocation5 + $0x20] sm:$0xf]
    %v69 = vld [vmem:[#allocation5 + $0x24] sm:$0xf]
    %v70 = vld [vmem:[#allocation5 + $0x28] sm:$0xf]
    %v71 = vld [vmem:[#allocation5 + $0x2c] sm:$0xf]
    %v72 = vld [vmem:[#allocation5 + $0x30] sm:$0xf]
    %v73 = vld [vmem:[#allocation5 + $0x34] sm:$0xf]
    %v74 = vld [vmem:[#allocation5 + $0x38] sm:$0xf]
    %v75 = vld [vmem:[#allocation5 + $0x3c] sm:$0xf]
    %v76 = vld [vmem:[#allocation7] sm:$0xf]
    %v77 = vld [vmem:[#allocation7 + $0x4] sm:$0xf]
    %v78 = vld [vmem:[#allocation7 + $0x8] sm:$0xf]
    %v79 = vld [vmem:[#allocation7 + $0xc] sm:$0xf]
    %v80 = vld [vmem:[#allocation7 + $0x10] sm:$0xf]
    %v81 = vld [vmem:[#allocation7 + $0x14] sm:$0xf]
    %v82 = vld [vmem:[#allocation7 + $0x18] sm:$0xf]
    %v83 = vld [vmem:[#allocation7 + $0x1c] sm:$0xf]
    %v84 = vld [vmem:[#allocation7 + $0x20] sm:$0xf]
    %v85 = vld [vmem:[#allocation7 + $0x24] sm:$0xf]
    %v86 = vld [vmem:[#allocation7 + $0x28] sm:$0xf]
    %v87 = vld [vmem:[#allocation7 + $0x2c] sm:$0xf]
    %v88 = vld [vmem:[#allocation7 + $0x30] sm:$0xf]
    %v89 = vld [vmem:[#allocation7 + $0x34] sm:$0xf]
    %v90 = vld [vmem:[#allocation7 + $0x38] sm:$0xf]
    %v91 = vld [vmem:[#allocation7 + $0x3c] sm:$0xf]
    %v108 = vunpack.c.l.b16 %v60
    %v109 = vunpack.c.l.b16 %v61
    %v110 = vunpack.c.l.b16 %v62
    %v111 = vunpack.c.l.b16 %v63
    %v112 = vunpack.c.l.b16 %v64
    %v113 = vunpack.c.l.b16 %v65
    %v114 = vunpack.c.l.b16 %v66
    %v115 = vunpack.c.l.b16 %v67
    %v116 = vunpack.c.l.b16 %v68
    %v117 = vunpack.c.l.b16 %v69
    %v118 = vunpack.c.l.b16 %v70
    %v119 = vunpack.c.l.b16 %v71
    %v120 = vunpack.c.l.b16 %v72
    %v121 = vunpack.c.l.b16 %v73
    %v122 = vunpack.c.l.b16 %v74
    %v123 = vunpack.c.l.b16 %v75
    %v124 = vpack.c.b16 %v109, %v108
    %v125 = vpack.c.b16 %v111, %v110
    %v126 = vpack.c.b16 %v113, %v112
    %v127 = vpack.c.b16 %v115, %v114
    %v128 = vpack.c.b16 %v117, %v116
    %v129 = vpack.c.b16 %v119, %v118
    %v130 = vpack.c.b16 %v121, %v120
    %v131 = vpack.c.b16 %v123, %v122
    %v156 = vunpack.c.l.b16 %v76
    %v157 = vunpack.c.l.b16 %v77
    %v158 = vunpack.c.l.b16 %v78
    %v159 = vunpack.c.l.b16 %v79
    %v160 = vunpack.c.l.b16 %v80
    %v161 = vunpack.c.l.b16 %v81
    %v162 = vunpack.c.l.b16 %v82
    %v163 = vunpack.c.l.b16 %v83
    %v164 = vunpack.c.l.b16 %v84
    %v165 = vunpack.c.l.b16 %v85
    %v166 = vunpack.c.l.b16 %v86
    %v167 = vunpack.c.l.b16 %v87
    %v168 = vunpack.c.l.b16 %v88
    %v169 = vunpack.c.l.b16 %v89
    %v170 = vunpack.c.l.b16 %v90
    %v171 = vunpack.c.l.b16 %v91
    %v172 = vpack.c.b16 %v157, %v156
    %v173 = vpack.c.b16 %v159, %v158
    %v174 = vpack.c.b16 %v161, %v160
    %v175 = vpack.c.b16 %v163, %v162
    %v176 = vpack.c.b16 %v165, %v164
    %v177 = vpack.c.b16 %v167, %v166
    %v178 = vpack.c.b16 %v169, %v168
    %v179 = vpack.c.b16 %v171, %v170
    %188 = vmatprep.subr.bf16.mxu0 0
    %189 = vmatpush1.bf16.msra.mxu0 %v179
    %190 = vmatprep.subr.bf16.mxu0 0
    %191 = vmatpush1.bf16.msra.mxu0 %v178
    %192 = vmatprep.subr.bf16.mxu0 0
    %193 = vmatpush1.bf16.msra.mxu0 %v177
    %194 = vmatprep.subr.bf16.mxu0 0
    %195 = vmatpush1.bf16.msra.mxu0 %v176
    %196 = vmatprep.subr.bf16.mxu0 0
    %197 = vmatpush1.bf16.msra.mxu0 %v175
    %198 = vmatprep.subr.bf16.mxu0 0
    %199 = vmatpush1.bf16.msra.mxu0 %v174
    %200 = vmatprep.subr.bf16.mxu0 0
    %201 = vmatpush1.bf16.msra.mxu0 %v173
    %202 = vmatprep.subr.bf16.mxu0 0
    %203 = vmatpush1.bf16.msra.mxu0 %v172
    %204 = vmatprep.subr.bf16.mxu0 0
    %205 = vmatpush2.bf16.msra.mxu0 0
    %206 = vmatprep.subr.bf16.mxu0 0
    %207 = vmatpush2.bf16.msra.mxu0 0
    %208 = vmatprep.subr.bf16.mxu0 0
    %209 = vmatpush2.bf16.msra.mxu0 0
    %210 = vmatprep.subr.bf16.mxu0 0
    %211 = vmatpush2.bf16.msra.mxu0 0
    %212 = vmatprep.subr.bf16.mxu0 0
    %213 = vmatpush2.bf16.msra.mxu0 0
    %214 = vmatprep.subr.bf16.mxu0 0
    %215 = vmatpush2.bf16.msra.mxu0 0
    %216 = vmatprep.subr.bf16.mxu0 0
    %217 = vmatpush2.bf16.msra.mxu0 0
    %218 = vmatprep.subr.bf16.mxu0 0
    %219 = vmatpush2.bf16.msra.mxu0 0
    %220 = vmatprep.mubr.bf16.mxu0 0
    %221 = vmatmul.mubr.bf16.gmra.mxu0 %v124
    %v222 = vpop.f32.mrf.mxu0
    %v223 = vadd.f32 0.0, %v222
    %v224 = vpop.f32.mrf.mxu0
    %v225 = vpop.f32.mrf.mxu0
    %v226 = vadd.f32 0.0, %v225
    %v227 = vpop.f32.mrf.mxu0
    %228 = vmatprep.mubr.bf16.mxu0 0
    %229 = vmatmul.mubr.bf16.gmra.mxu0 %v125
    %v230 = vpop.f32.mrf.mxu0
    %v231 = vadd.f32 0.0, %v230
    %v232 = vpop.f32.mrf.mxu0
    %v233 = vpop.f32.mrf.mxu0
    %v234 = vadd.f32 0.0, %v233
    %v235 = vpop.f32.mrf.mxu0
    %236 = vmatprep.mubr.bf16.mxu0 0
    %237 = vmatmul.mubr.bf16.gmra.mxu0 %v126
    %v238 = vpop.f32.mrf.mxu0
    %v239 = vadd.f32 0.0, %v238
    %v240 = vpop.f32.mrf.mxu0
    %v241 = vpop.f32.mrf.mxu0
    %v242 = vadd.f32 0.0, %v241
    %v243 = vpop.f32.mrf.mxu0
    %244 = vmatprep.mubr.bf16.mxu0 0
    %245 = vmatmul.mubr.bf16.gmra.mxu0 %v127
    %v246 = vpop.f32.mrf.mxu0
    %v247 = vadd.f32 0.0, %v246
    %v248 = vpop.f32.mrf.mxu0
    %v249 = vpop.f32.mrf.mxu0
    %v250 = vadd.f32 0.0, %v249
    %v251 = vpop.f32.mrf.mxu0
    %252 = vmatprep.mubr.bf16.mxu0 0
    %253 = vmatmul.mubr.bf16.gmra.mxu0 %v128
    %v254 = vpop.f32.mrf.mxu0
    %v255 = vadd.f32 0.0, %v254
    %v256 = vpop.f32.mrf.mxu0
    %v257 = vpop.f32.mrf.mxu0
    %v258 = vadd.f32 0.0, %v257
    %v259 = vpop.f32.mrf.mxu0
    %260 = vmatprep.mubr.bf16.mxu0 0
    %261 = vmatmul.mubr.bf16.gmra.mxu0 %v129
    %v262 = vpop.f32.mrf.mxu0
    %v263 = vadd.f32 0.0, %v262
    %v264 = vpop.f32.mrf.mxu0
    %v265 = vpop.f32.mrf.mxu0
    %v266 = vadd.f32 0.0, %v265
    %v267 = vpop.f32.mrf.mxu0
    %268 = vmatprep.mubr.bf16.mxu0 0
    %269 = vmatmul.mubr.bf16.gmra.mxu0 %v130
    %v270 = vpop.f32.mrf.mxu0
    %v271 = vadd.f32 0.0, %v270
    %v272 = vpop.f32.mrf.mxu0
    %v273 = vpop.f32.mrf.mxu0
    %v274 = vadd.f32 0.0, %v273
    %v275 = vpop.f32.mrf.mxu0
    %276 = vmatprep.mubr.bf16.mxu0 0
    %277 = vmatmul.mubr.bf16.gmra.mxu0 %v131
    %v278 = vpop.f32.mrf.mxu0
    %v279 = vadd.f32 0.0, %v278
    %v280 = vpop.f32.mrf.mxu0
    %v281 = vpop.f32.mrf.mxu0
    %v282 = vadd.f32 0.0, %v281
    %v283 = vpop.f32.mrf.mxu0
    %284 = vdwg.mxu0
    %v285 = vld [vmem:[#allocation2] sm:$0xf]
    %v286 = vld [vmem:[#allocation2 + $0x4] sm:$0xf]
    %v287 = vld [vmem:[#allocation2 + $0x8] sm:$0xf]
    %v288 = vld [vmem:[#allocation2 + $0xc] sm:$0xf]
    %v289 = vld [vmem:[#allocation2 + $0x10] sm:$0xf]
    %v290 = vld [vmem:[#allocation2 + $0x14] sm:$0xf]
    %v291 = vld [vmem:[#allocation2 + $0x18] sm:$0xf]
    %v292 = vld [vmem:[#allocation2 + $0x1c] sm:$0xf]
    %v293 = vld [vmem:[#allocation2 + $0x20] sm:$0xf]
    %v294 = vld [vmem:[#allocation2 + $0x24] sm:$0xf]
    %v295 = vld [vmem:[#allocation2 + $0x28] sm:$0xf]
    %v296 = vld [vmem:[#allocation2 + $0x2c] sm:$0xf]
    %v297 = vld [vmem:[#allocation2 + $0x30] sm:$0xf]
    %v298 = vld [vmem:[#allocation2 + $0x34] sm:$0xf]
    %v299 = vld [vmem:[#allocation2 + $0x38] sm:$0xf]
    %v300 = vld [vmem:[#allocation2 + $0x3c] sm:$0xf]
    %v301 = vpack.c.bf16 %v226, %v223
    %v302 = vpack.c.bf16 %v234, %v231
    %v303 = vpack.c.bf16 %v242, %v239
    %v304 = vpack.c.bf16 %v250, %v247
    %v305 = vpack.c.bf16 %v258, %v255
    %v306 = vpack.c.bf16 %v266, %v263
    %v307 = vpack.c.bf16 %v274, %v271
    %v308 = vpack.c.bf16 %v282, %v279
    %v309 = vld [vmem:[%s3] sm:$0x1]
    %v311 = vlaneseq
    %v312 = vshrl.u32 %v311, 7
    %v313 = vsub.s32 0, %v312
    %v314 = vrot.slane %v309, %v313
    %v332 = vunpack.c.l.b16 %v285
    %v333 = vunpack.c.l.b16 %v286
    %v334 = vunpack.c.l.b16 %v287
    %v335 = vunpack.c.l.b16 %v288
    %v336 = vunpack.c.l.b16 %v289
    %v337 = vunpack.c.l.b16 %v290
    %v338 = vunpack.c.l.b16 %v291
    %v339 = vunpack.c.l.b16 %v292
    %v340 = vunpack.c.l.b16 %v293
    %v341 = vunpack.c.l.b16 %v294
    %v342 = vunpack.c.l.b16 %v295
    %v343 = vunpack.c.l.b16 %v296
    %v344 = vunpack.c.l.b16 %v297
    %v345 = vunpack.c.l.b16 %v298
    %v346 = vunpack.c.l.b16 %v299
    %v347 = vunpack.c.l.b16 %v300
    %v348 = vpack.c.b16 %v333, %v332
    %v349 = vpack.c.b16 %v335, %v334
    %v350 = vpack.c.b16 %v337, %v336
    %v351 = vpack.c.b16 %v339, %v338
    %v352 = vpack.c.b16 %v341, %v340
    %v353 = vpack.c.b16 %v343, %v342
    %v354 = vpack.c.b16 %v345, %v344
    %v355 = vpack.c.b16 %v347, %v346
    %364 = vmatprep.subr.bf16.mxu0 0
    %365 = vmatpush1.bf16.msra.mxu0 %v308
    %366 = vmatprep.subr.bf16.mxu0 0
    %367 = vmatpush1.bf16.msra.mxu0 %v307
    %368 = vmatprep.subr.bf16.mxu0 0
    %369 = vmatpush1.bf16.msra.mxu0 %v306
    %370 = vmatprep.subr.bf16.mxu0 0
    %371 = vmatpush1.bf16.msra.mxu0 %v305
    %372 = vmatprep.subr.bf16.mxu0 0
    %373 = vmatpush1.bf16.msra.mxu0 %v304
    %374 = vmatprep.subr.bf16.mxu0 0
    %375 = vmatpush1.bf16.msra.mxu0 %v303
    %376 = vmatprep.subr.bf16.mxu0 0
    %377 = vmatpush1.bf16.msra.mxu0 %v302
    %378 = vmatprep.subr.bf16.mxu0 0
    %379 = vmatpush1.bf16.msra.mxu0 %v301
    %380 = vmatprep.subr.bf16.mxu0 0
    %381 = vmatpush2.bf16.msra.mxu0 0
    %382 = vmatprep.subr.bf16.mxu0 0
    %383 = vmatpush2.bf16.msra.mxu0 0
    %384 = vmatprep.subr.bf16.mxu0 0
    %385 = vmatpush2.bf16.msra.mxu0 0
    %386 = vmatprep.subr.bf16.mxu0 0
    %387 = vmatpush2.bf16.msra.mxu0 0
    %388 = vmatprep.subr.bf16.mxu0 0
    %389 = vmatpush2.bf16.msra.mxu0 0
    %390 = vmatprep.subr.bf16.mxu0 0
    %391 = vmatpush2.bf16.msra.mxu0 0
    %392 = vmatprep.subr.bf16.mxu0 0
    %393 = vmatpush2.bf16.msra.mxu0 0
    %394 = vmatprep.subr.bf16.mxu0 0
    %395 = vmatpush2.bf16.msra.mxu0 0
    %396 = vmatprep.mubr.bf16.mxu0 0
    %397 = vmatmul.mubr.bf16.gmra.mxu0 %v348
    %v398 = vpop.f32.mrf.mxu0
    %v399 = vadd.f32 %v314, %v398
    %v400 = vpop.f32.mrf.mxu0
    %v401 = vpop.f32.mrf.mxu0
    %v402 = vadd.f32 %v314, %v401
    %v403 = vpop.f32.mrf.mxu0
    %404 = vmatprep.mubr.bf16.mxu0 0
    %405 = vmatmul.mubr.bf16.gmra.mxu0 %v349
    %v406 = vpop.f32.mrf.mxu0
    %v407 = vadd.f32 %v314, %v406
    %v408 = vpop.f32.mrf.mxu0
    %v409 = vpop.f32.mrf.mxu0
    %v410 = vadd.f32 %v314, %v409
    %v411 = vpop.f32.mrf.mxu0
    %412 = vmatprep.mubr.bf16.mxu0 0
    %413 = vmatmul.mubr.bf16.gmra.mxu0 %v350
    %v414 = vpop.f32.mrf.mxu0
    %v415 = vadd.f32 %v314, %v414
    %v416 = vpop.f32.mrf.mxu0
    %v417 = vpop.f32.mrf.mxu0
    %v418 = vadd.f32 %v314, %v417
    %v419 = vpop.f32.mrf.mxu0
    %420 = vmatprep.mubr.bf16.mxu0 0
    %421 = vmatmul.mubr.bf16.gmra.mxu0 %v351
    %v422 = vpop.f32.mrf.mxu0
    %v423 = vadd.f32 %v314, %v422
    %v424 = vpop.f32.mrf.mxu0
    %v425 = vpop.f32.mrf.mxu0
    %v426 = vadd.f32 %v314, %v425
    %v427 = vpop.f32.mrf.mxu0
    %428 = vmatprep.mubr.bf16.mxu0 0
    %429 = vmatmul.mubr.bf16.gmra.mxu0 %v352
    %v430 = vpop.f32.mrf.mxu0
    %v431 = vadd.f32 %v314, %v430
    %v432 = vpop.f32.mrf.mxu0
    %v433 = vpop.f32.mrf.mxu0
    %v434 = vadd.f32 %v314, %v433
    %v435 = vpop.f32.mrf.mxu0
    %436 = vmatprep.mubr.bf16.mxu0 0
    %437 = vmatmul.mubr.bf16.gmra.mxu0 %v353
    %v438 = vpop.f32.mrf.mxu0
    %v439 = vadd.f32 %v314, %v438
    %v440 = vpop.f32.mrf.mxu0
    %v441 = vpop.f32.mrf.mxu0
    %v442 = vadd.f32 %v314, %v441
    %v443 = vpop.f32.mrf.mxu0
    %444 = vmatprep.mubr.bf16.mxu0 0
    %445 = vmatmul.mubr.bf16.gmra.mxu0 %v354
    %v446 = vpop.f32.mrf.mxu0
    %v447 = vadd.f32 %v314, %v446
    %v448 = vpop.f32.mrf.mxu0
    %v449 = vpop.f32.mrf.mxu0
    %v450 = vadd.f32 %v314, %v449
    %v451 = vpop.f32.mrf.mxu0
    %452 = vmatprep.mubr.bf16.mxu0 0
    %453 = vmatmul.mubr.bf16.gmra.mxu0 %v355
    %v454 = vpop.f32.mrf.mxu0
    %v455 = vadd.f32 %v314, %v454
    %v456 = vpop.f32.mrf.mxu0
    %v457 = vpop.f32.mrf.mxu0
    %v458 = vadd.f32 %v314, %v457
    %v459 = vpop.f32.mrf.mxu0
    %460 = vdwg.mxu0
    %v461 = vmax.f32 %v399, 0.0
    %v462 = vmax.f32 %v402, 0.0
    %v463 = vmax.f32 %v407, 0.0
    %v464 = vmax.f32 %v410, 0.0
    %v465 = vmax.f32 %v415, 0.0
    %v466 = vmax.f32 %v418, 0.0
    %v467 = vmax.f32 %v423, 0.0
    %v468 = vmax.f32 %v426, 0.0
    %v469 = vmax.f32 %v431, 0.0
    %v470 = vmax.f32 %v434, 0.0
    %v471 = vmax.f32 %v439, 0.0
    %v472 = vmax.f32 %v442, 0.0
    %v473 = vmax.f32 %v447, 0.0
    %v474 = vmax.f32 %v450, 0.0
    %v475 = vmax.f32 %v455, 0.0
    %v476 = vmax.f32 %v458, 0.0
    %v477 = vpack.c.bf16 %v462, %v461
    %v478 = vpack.c.bf16 %v464, %v463
    %v479 = vpack.c.bf16 %v466, %v465
    %v480 = vpack.c.bf16 %v468, %v467
    %v481 = vpack.c.bf16 %v470, %v469
    %v482 = vpack.c.bf16 %v472, %v471
    %v483 = vpack.c.bf16 %v474, %v473
    %v484 = vpack.c.bf16 %v476, %v475
    %v493 = vunpack.c.l.b16 %v477
    %v494 = vunpack.c.h.b16 %v477
    %v495 = vunpack.c.l.b16 %v478
    %v496 = vunpack.c.h.b16 %v478
    %v497 = vunpack.c.l.b16 %v479
    %v498 = vunpack.c.h.b16 %v479
    %v499 = vunpack.c.l.b16 %v480
    %v500 = vunpack.c.h.b16 %v480
    %v501 = vunpack.c.l.b16 %v481
    %v502 = vunpack.c.h.b16 %v481
    %v503 = vunpack.c.l.b16 %v482
    %v504 = vunpack.c.h.b16 %v482
    %v505 = vunpack.c.l.b16 %v483
    %v506 = vunpack.c.h.b16 %v483
    %v507 = vunpack.c.l.b16 %v484
    %v508 = vunpack.c.h.b16 %v484
    %v509 = vpack.c.b16 %v493, %v493
    %v510 = vpack.c.b16 %v494, %v494
    %v511 = vpack.c.b16 %v495, %v495
    %v512 = vpack.c.b16 %v496, %v496
    %v513 = vpack.c.b16 %v497, %v497
    %v514 = vpack.c.b16 %v498, %v498
    %v515 = vpack.c.b16 %v499, %v499
    %v516 = vpack.c.b16 %v500, %v500
    %v517 = vpack.c.b16 %v501, %v501
    %v518 = vpack.c.b16 %v502, %v502
    %v519 = vpack.c.b16 %v503, %v503
    %v520 = vpack.c.b16 %v504, %v504
    %v521 = vpack.c.b16 %v505, %v505
    %v522 = vpack.c.b16 %v506, %v506
    %v523 = vpack.c.b16 %v507, %v507
    %v524 = vpack.c.b16 %v508, %v508
    %541 = vst [vmem:[#allocation8] sm:$0xf] %v509
    %542 = vst [vmem:[#allocation8 + $0x4] sm:$0xf] %v510
    %543 = vst [vmem:[#allocation8 + $0x8] sm:$0xf] %v511
    %544 = vst [vmem:[#allocation8 + $0xc] sm:$0xf] %v512
    %545 = vst [vmem:[#allocation8 + $0x10] sm:$0xf] %v513
    %546 = vst [vmem:[#allocation8 + $0x14] sm:$0xf] %v514
    %547 = vst [vmem:[#allocation8 + $0x18] sm:$0xf] %v515
    %548 = vst [vmem:[#allocation8 + $0x1c] sm:$0xf] %v516
    %549 = vst [vmem:[#allocation8 + $0x20] sm:$0xf] %v517
    %550 = vst [vmem:[#allocation8 + $0x24] sm:$0xf] %v518
    %551 = vst [vmem:[#allocation8 + $0x28] sm:$0xf] %v519
    %552 = vst [vmem:[#allocation8 + $0x2c] sm:$0xf] %v520
    %553 = vst [vmem:[#allocation8 + $0x30] sm:$0xf] %v521
    %554 = vst [vmem:[#allocation8 + $0x34] sm:$0xf] %v522
    %555 = vst [vmem:[#allocation8 + $0x38] sm:$0xf] %v523
    %556 = vst [vmem:[#allocation8 + $0x3c] sm:$0xf] %v524
    // Predicated region
    $region30: #{tpu_custom_call.1} parent=1 // pred_check
      _
    $region31: #{tpu_custom_call.1} parent=1 // pred_check_branch
      %558 = sbr.rel (0) target = $region33
    $region32: #{tpu_custom_call.1} parent=1 // pred_region
      %s560 = ssub.s32 1024, 1024
      %561 = vsyncadd [#allocation4], %s560
      %s562 = sshll.u32 [#allocation8], 4
      %s563 = int_to_ptr.vmem [resolvable:$true] %s562
      %568 = dma.vmem_to_hbm [thread:$0]  %s563, 1024, %s4, [#allocation4], 64, 64, 4
    $region33: #{tpu_custom_call.1} parent=1 // pred_fallthru
      _
    // Predicated region
    $region34: #{tpu_custom_call.1} parent=1 // pred_check
      _
    $region35: #{tpu_custom_call.1} parent=1 // pred_check_branch
      %570 = sbr.rel (0) target = $region37
    $region36: #{tpu_custom_call.1} parent=1 // pred_region
      %571 = dma.done [#allocation4], 1024
    $region37: #{tpu_custom_call.1} parent=1 // pred_fallthru
      _
    %572 = vsyncpa [#allocation3], 1
    %573 = vsyncpa [#allocation6], 1
    %574 = vsyncpa [#allocation4], 1

</llo_original>
